<compile_context>
chip_gen: v5e
topology: v5e:2x2
jax: 0.10.0
libtpu: 0.0.40
codegen_flags: <defaults>
</compile_context>

<pallas_src>
import jax
import jax.numpy as jnp
from jax.experimental import pallas as pl
from jax.experimental.pallas import tpu as pltpu


def attention_kernel(x_ref, w_ref, bw_ref, v_ref, fcw_ref, fcb_ref, o_ref):
    Bt, S, D = x_ref.shape

    x3 = x_ref[...]                                # (Bt, S, D)
    x2 = x3.reshape(Bt * S, D)                     # fold batch into MXU M-dim

    # q = W(x): (Bt*S, D) @ (D, D) + (1, D)
    q = jnp.dot(x2, w_ref[...], preferred_element_type=jnp.float32) + bw_ref[...]
    t = jnp.tanh(q)                                # EUP
    # V(tanh(q)) (no bias): (Bt*S, D) @ (D, D)
    s2 = jnp.dot(t, v_ref[...], preferred_element_type=jnp.float32)

    # softmax over the sequence axis (PyTorch dim=1), per batch element
    s3 = s2.reshape(Bt, S, D)                      # (Bt, S, D)
    m = jnp.max(s3, axis=1, keepdims=True)         # (Bt, 1, D)  XLU reduce
    e = jnp.exp(s3 - m)                            # (Bt, S, D)  EUP
    denom = jnp.sum(e, axis=1, keepdims=True)      # (Bt, 1, D)
    # exact reciprocal keeps the 1e-5 tolerance; approx=True would move it to
    # the (otherwise idle) EUP slot at ~2^-12 relative error.
    attn = e * pl.reciprocal(denom, approx=False)  # (Bt, S, D)

    # gate the input, then fc: D -> lane-padded out (real out_dim columns
    # first, zero-padded to a 128-lane tile so the store is an unmasked vst).
    attended = (attn * x3).reshape(Bt * S, D)
    out = jnp.dot(attended, fcw_ref[...],
                  preferred_element_type=jnp.float32) + fcb_ref[...]  # (Bt*S, LANE)

    # single contiguous, lane-dense block store
    o_ref[...] = out.astype(o_ref.dtype)


def attention_forward(x, w_t, b_w, v_t, fc_w_t, fc_b, *, batch_tile=None):
    """x: (B, S, D) float32.
    w_t, v_t: (D, D) pre-transposed linear weights (y = x @ W^T form).
    b_w: (1, D), fc_w_t: (D, out_dim), fc_b: (1, out_dim)."""
    B, S, D = x.shape
    out_dim = fc_w_t.shape[1]

    # Lane-pad fc weight/bias so the kernel's output tile is a dense multiple
    # of 128 lanes (unmasked vst) instead of a masked width-`out_dim` store.
    lane = max(128, ((out_dim + 127) // 128) * 128)
    fc_w_pad = jnp.pad(fc_w_t, ((0, 0), (0, lane - out_dim)))
    fc_b_pad = jnp.pad(fc_b, ((0, 0), (0, lane - out_dim)))

    if batch_tile is None:
        # Single merged step by default (per-step overhead dominates at small
        # sizes on every generation). Only split across the two v7x
        # TensorCores when each step still has enough fused rows of work.
        if B % 2 == 0 and (B // 2) * S >= 256:
            batch_tile = B // 2
        else:
            batch_tile = B
    assert B % batch_tile == 0
    num_steps = B // batch_tile
    if batch_tile > 1:
        # (Bt,S,D)<->(Bt*S,D) folds are free relayouts only when folded rows
        # land on f32 sublane-tile boundaries.
        assert S % 8 == 0, "S must be a multiple of 8 when folding batch>1"

    dim_sem = ("parallel",) if num_steps > 1 else ("arbitrary",)

    out_flat = pl.pallas_call(
        attention_kernel,
        out_shape=jax.ShapeDtypeStruct((B * S, lane), x.dtype),
        grid_spec=pltpu.PrefetchScalarGridSpec(
            num_scalar_prefetch=0,
            grid=(num_steps,),
            in_specs=[
                pl.BlockSpec((batch_tile, S, D), lambda b: (b, 0, 0)),   # x
                pl.BlockSpec((D, D), lambda b: (0, 0)),                  # W^T
                pl.BlockSpec((1, D), lambda b: (0, 0)),                  # W bias
                pl.BlockSpec((D, D), lambda b: (0, 0)),                  # V^T
                pl.BlockSpec((D, lane), lambda b: (0, 0)),               # fc^T (padded)
                pl.BlockSpec((1, lane), lambda b: (0, 0)),               # fc bias (padded)
            ],
            out_specs=pl.BlockSpec((batch_tile * S, lane), lambda b: (b, 0)),
        ),
        compiler_params=pltpu.CompilerParams(dimension_semantics=dim_sem),
    )(x, w_t, b_w, v_t, fc_w_pad, fc_b_pad)

    # Drop the lane padding and restore (B, S, out_dim).
    return out_flat[:, :out_dim].reshape(B, S, out_dim)


def reference_forward(x, w_t, b_w, v_t, fc_w_t, fc_b):
    q = jnp.einsum("bsd,de->bse", x, w_t) + b_w[0]
    s = jnp.einsum("bsd,de->bse", jnp.tanh(q), v_t)
    attn = jax.nn.softmax(s, axis=1)
    attended = attn * x
    return jnp.einsum("bsd,de->bse", attended, fc_w_t) + fc_b[0]


if __name__ == "__main__":
    B, S, D = 2, 8, 32

    key = jax.random.PRNGKey(0)
    kx, kw, kbw, kv, kfw, kfb = jax.random.split(key, 6)

    x = jax.random.normal(kx, (B, S, D), dtype=jnp.float32)

    # Parameters (deterministic init). PyTorch nn.Linear stores weight as
    # (out, in); we create them directly in transposed (in, out) form.
    scale = 1.0 / jnp.sqrt(jnp.float32(D))
    w_t = jax.random.uniform(kw, (D, D), jnp.float32, -scale, scale)      # W.weight^T
    b_w = jax.random.uniform(kbw, (1, D), jnp.float32, -scale, scale)     # W.bias
    v_t = jax.random.uniform(kv, (D, D), jnp.float32, -scale, scale)      # V.weight^T
    fc_w_t = jax.random.uniform(kfw, (D, 2), jnp.float32, -scale, scale)  # fc.weight^T
    fc_b = jax.random.uniform(kfb, (1, 2), jnp.float32, -scale, scale)    # fc.bias

    ref = reference_forward(x, w_t, b_w, v_t, fc_w_t, fc_b)

    # Default: single grid step, batch folded into the matmul M-dim,
    # lane-dense (128-wide) output store.
    out = jax.block_until_ready(attention_forward(x, w_t, b_w, v_t, fc_w_t, fc_b))
    assert out.shape == (B, S, 2)
    assert jnp.allclose(out, ref, atol=1e-5, rtol=1e-5), "mismatch vs reference"

    # Forced two-step variant exercises the multi-step grid path (only ever
    # chosen automatically when each step has >= 256 fused rows of work).
    out_split = jax.block_until_ready(
        attention_forward(x, w_t, b_w, v_t, fc_w_t, fc_b, batch_tile=1))
    assert jnp.allclose(out_split, ref, atol=1e-5, rtol=1e-5), "split mismatch"

    print("KERNEL_OK")
</pallas_src>

<mosaic_0001>
module attributes {stable_mosaic.version = 11 : i64} {
  func.func @attention_kernel(%arg0: i32, %arg1: memref<2x8x32xf32, #tpu.memory_space<vmem>>, %arg2: memref<32x32xf32, #tpu.memory_space<vmem>>, %arg3: memref<1x32xf32, #tpu.memory_space<vmem>>, %arg4: memref<32x32xf32, #tpu.memory_space<vmem>>, %arg5: memref<32x128xf32, #tpu.memory_space<vmem>>, %arg6: memref<1x128xf32, #tpu.memory_space<vmem>>, %arg7: memref<16x128xf32, #tpu.memory_space<vmem>>) attributes {dimension_semantics = [#tpu.dimension_semantics<arbitrary>], iteration_bounds = array<i64: 1>, scalar_prefetch = 0 : i64, scratch_operands = 0 : i64, tpu.core_type = #tpu.core_type<tc>, window_params = [{transform_indices = @transform_0, window_bounds = array<i64: 2, 8, 32>}, {pipeline_mode = #tpu.pipeline_mode<synchronous>, transform_indices = @transform_1, window_bounds = array<i64: 32, 32>}, {pipeline_mode = #tpu.pipeline_mode<synchronous>, transform_indices = @transform_2, window_bounds = array<i64: 1, 32>}, {pipeline_mode = #tpu.pipeline_mode<synchronous>, transform_indices = @transform_3, window_bounds = array<i64: 32, 32>}, {pipeline_mode = #tpu.pipeline_mode<synchronous>, transform_indices = @transform_4, window_bounds = array<i64: 32, 128>}, {pipeline_mode = #tpu.pipeline_mode<synchronous>, transform_indices = @transform_5, window_bounds = array<i64: 1, 128>}, {transform_indices = @transform_6, window_bounds = array<i64: 16, 128>}]} {
    %c0 = arith.constant 0 : index
    %c0_0 = arith.constant 0 : index
    %c0_1 = arith.constant 0 : index
    %0 = vector.load %arg1[%c0, %c0_0, %c0_1] : memref<2x8x32xf32, #tpu.memory_space<vmem>>, vector<2x8x32xf32>
    %1 = vector.shape_cast %0 : vector<2x8x32xf32> to vector<16x32xf32>
    %c0_2 = arith.constant 0 : index
    %c0_3 = arith.constant 0 : index
    %2 = vector.load %arg2[%c0_2, %c0_3] : memref<32x32xf32, #tpu.memory_space<vmem>>, vector<32x32xf32>
    %cst = arith.constant dense<0.000000e+00> : vector<16x32xf32>
    %3 = tpu.matmul %1, %2, %cst {dimension_numbers = #tpu.dot_dimension_numbers<[1], [0], [0], [1], [0, 0, 1, 1], [], []>} : vector<16x32xf32>, vector<32x32xf32>, vector<16x32xf32> -> vector<16x32xf32>
    %c0_4 = arith.constant 0 : index
    %c0_5 = arith.constant 0 : index
    %4 = vector.load %arg3[%c0_4, %c0_5] : memref<1x32xf32, #tpu.memory_space<vmem>>, vector<1x32xf32>
    %5 = vector.broadcast %4 : vector<1x32xf32> to vector<16x32xf32>
    %6 = arith.addf %3, %5 : vector<16x32xf32>
    %7 = math.tanh %6 : vector<16x32xf32>
    %c0_6 = arith.constant 0 : index
    %c0_7 = arith.constant 0 : index
    %8 = vector.load %arg4[%c0_6, %c0_7] : memref<32x32xf32, #tpu.memory_space<vmem>>, vector<32x32xf32>
    %cst_8 = arith.constant dense<0.000000e+00> : vector<16x32xf32>
    %9 = tpu.matmul %7, %8, %cst_8 {dimension_numbers = #tpu.dot_dimension_numbers<[1], [0], [0], [1], [0, 0, 1, 1], [], []>} : vector<16x32xf32>, vector<32x32xf32>, vector<16x32xf32> -> vector<16x32xf32>
    %10 = vector.shape_cast %9 : vector<16x32xf32> to vector<2x8x32xf32>
    %cst_9 = arith.constant dense<0xFF800000> : vector<2x32xf32>
    %11 = vector.multi_reduction <maximumf>, %10, %cst_9 [1] : vector<2x8x32xf32> to vector<2x32xf32>
    %12 = vector.shape_cast %11 : vector<2x32xf32> to vector<2x1x32xf32>
    %13 = vector.broadcast %12 : vector<2x1x32xf32> to vector<2x8x32xf32>
    %14 = arith.subf %10, %13 : vector<2x8x32xf32>
    %15 = math.exp %14 : vector<2x8x32xf32>
    %cst_10 = arith.constant dense<0.000000e+00> : vector<2x32xf32>
    %16 = vector.multi_reduction <add>, %15, %cst_10 [1] : vector<2x8x32xf32> to vector<2x32xf32>
    %17 = vector.shape_cast %16 : vector<2x32xf32> to vector<2x1x32xf32>
    %18 = tpu.reciprocal %17 : vector<2x1x32xf32> -> vector<2x1x32xf32>
    %19 = vector.broadcast %18 : vector<2x1x32xf32> to vector<2x8x32xf32>
    %20 = arith.mulf %15, %19 : vector<2x8x32xf32>
    %21 = arith.mulf %20, %0 : vector<2x8x32xf32>
    %22 = vector.shape_cast %21 : vector<2x8x32xf32> to vector<16x32xf32>
    %c0_11 = arith.constant 0 : index
    %c0_12 = arith.constant 0 : index
    %23 = vector.load %arg5[%c0_11, %c0_12] : memref<32x128xf32, #tpu.memory_space<vmem>>, vector<32x128xf32>
    %cst_13 = arith.constant dense<0.000000e+00> : vector<16x128xf32>
    %24 = tpu.matmul %22, %23, %cst_13 {dimension_numbers = #tpu.dot_dimension_numbers<[1], [0], [0], [1], [0, 0, 1, 1], [], []>} : vector<16x32xf32>, vector<32x128xf32>, vector<16x128xf32> -> vector<16x128xf32>
    %c0_14 = arith.constant 0 : index
    %c0_15 = arith.constant 0 : index
    %25 = vector.load %arg6[%c0_14, %c0_15] : memref<1x128xf32, #tpu.memory_space<vmem>>, vector<1x128xf32>
    %26 = vector.broadcast %25 : vector<1x128xf32> to vector<16x128xf32>
    %27 = arith.addf %24, %26 : vector<16x128xf32>
    %c0_16 = arith.constant 0 : index
    %c0_17 = arith.constant 0 : index
    %28 = vector.load %arg7[%c0_16, %c0_17] : memref<16x128xf32, #tpu.memory_space<vmem>>, vector<16x128xf32>
    tpu.vector_store %arg7[%c0_16, %c0_17], %27 {strides = array<i32>} : memref<16x128xf32, #tpu.memory_space<vmem>>, vector<16x128xf32>,
    return
  }
  func.func @transform_0(%arg0: i32) -> (i32, i32, i32) {
    %c0_i32 = arith.constant 0 : i32
    %c0_i32_0 = arith.constant 0 : i32
    %c0_i32_1 = arith.constant 0 : i32
    return %arg0, %c0_i32, %c0_i32_0 : i32, i32, i32
  }
  func.func @transform_1(%arg0: i32) -> (i32, i32) {
    %c0_i32 = arith.constant 0 : i32
    %c0_i32_0 = arith.constant 0 : i32
    %c0_i32_1 = arith.constant 0 : i32
    return %c0_i32, %c0_i32_0 : i32, i32
  }
  func.func @transform_2(%arg0: i32) -> (i32, i32) {
    %c0_i32 = arith.constant 0 : i32
    %c0_i32_0 = arith.constant 0 : i32
    %c0_i32_1 = arith.constant 0 : i32
    return %c0_i32, %c0_i32_0 : i32, i32
  }
  func.func @transform_3(%arg0: i32) -> (i32, i32) {
    %c0_i32 = arith.constant 0 : i32
    %c0_i32_0 = arith.constant 0 : i32
    %c0_i32_1 = arith.constant 0 : i32
    return %c0_i32, %c0_i32_0 : i32, i32
  }
  func.func @transform_4(%arg0: i32) -> (i32, i32) {
    %c0_i32 = arith.constant 0 : i32
    %c0_i32_0 = arith.constant 0 : i32
    %c0_i32_1 = arith.constant 0 : i32
    return %c0_i32, %c0_i32_0 : i32, i32
  }
  func.func @transform_5(%arg0: i32) -> (i32, i32) {
    %c0_i32 = arith.constant 0 : i32
    %c0_i32_0 = arith.constant 0 : i32
    %c0_i32_1 = arith.constant 0 : i32
    return %c0_i32, %c0_i32_0 : i32, i32
  }
  func.func @transform_6(%arg0: i32) -> (i32, i32) {
    %c0_i32 = arith.constant 0 : i32
    %c0_i32_0 = arith.constant 0 : i32
    return %arg0, %c0_i32 : i32, i32
  }
}

</mosaic_0001>

<llo_original>
// kernel: tpu_custom_call.1
$region0: #{tpu_custom_call.1}
  #allocation0 [shape = 'u32[]', space=smem, size = 0x4, offset = 0x4, fixed_abs, tag = 'smem constant byte address 0x4 - core index']
  #allocation1 [shape = 'u32[72,128]{1,0:T(1,128)}', space=vmem, size = 0x9000, scoped, tag = 'internal scratch']
  %s0 = inlined_call_operand.hbm [shape: f32[2,8,32], index: 0, kind: input, shape index: {}]
  %s1 = inlined_call_operand.hbm [shape: f32[32,32], index: 1, kind: input, shape index: {}]
  %s2 = inlined_call_operand.vmem [shape: f32[1,32], index: 2, kind: input, shape index: {}]
  %s3 = inlined_call_operand.hbm [shape: f32[32,32], index: 3, kind: input, shape index: {}]
  %s4 = inlined_call_operand.hbm [shape: f32[32,128], index: 4, kind: input, shape index: {}]
  %s5 = inlined_call_operand.vmem [shape: f32[1,128], index: 5, kind: input, shape index: {}]
  %s6 = inlined_call_operand.hbm [shape: f32[16,128], index: 6, kind: output, shape index: {}]
  %s7 = sld [smem:[#allocation0]]
  $region50: #{tpu_custom_call.1} parent=0
    _
  %s9 = ssub.s32 1, %s7
  %s10 = scalar_select 0, %s9, %s7
  $region1: #{tpu_custom_call.1} parent=0
    #allocation2 [shape = 'u8[8192]{0}', space=vmem, size = 0x2000, scoped, tag = 'input window, operand 0, single buffered']
    #allocation3 [shape = 's32[1]{0}', space=sflag, size = 0x4, scoped, tag = 'scoped memory for tpu_custom_call.1']
    #allocation4 [shape = 's32[1]{0}', space=sflag, size = 0x4, scoped, tag = 'scoped memory for tpu_custom_call.1']
    #allocation5 [shape = 'u8[16384]{0}', space=vmem, size = 0x4000, scoped, tag = 'input window, operand 1, single buffered']
    #allocation6 [shape = 's32[1]{0}', space=sflag, size = 0x4, scoped, tag = 'scoped memory for tpu_custom_call.1']
    #allocation7 [shape = 'u8[16384]{0}', space=vmem, size = 0x4000, scoped, tag = 'input window, operand 3, single buffered']
    #allocation8 [shape = 'u8[16384]{0}', space=vmem, size = 0x4000, scoped, tag = 'input window, operand 4, single buffered']
    #allocation9 [shape = 's32[1]{0}', space=sflag, size = 0x4, scoped, tag = 'scoped memory for tpu_custom_call.1']
    #allocation10 [shape = 'u8[8192]{0}', space=vmem, size = 0x2000, scoped, tag = 'output window, operand 0, single buffered']
    %11 = vsyncpa [#allocation3], 0
    %12 = vsyncpa [#allocation6], 0
    %13 = vsyncpa [#allocation9], 0
    %14 = vsyncpa [#allocation4], 0
    // Predicated region
    $region2: #{tpu_custom_call.1} parent=1 // pred_check
      _
    $region3: #{tpu_custom_call.1} parent=1 // pred_check_branch
      %16 = sbr.rel (0) target = $region5
    $region4: #{tpu_custom_call.1} parent=1 // pred_region
      %18 = vsyncadd [#allocation3], 0
      %s19 = sshll.u32 %s0, 4
      %s20 = int_to_ptr.hbm [resolvable:$true] %s19
      %s21 = sshll.u32 [#allocation2], 4
      %s22 = int_to_ptr.vmem [resolvable:$true] %s21
      %27 = dma.hbm_to_vmem [thread:$0]  %s20, 256, %s22, [#allocation3], 128, 128, 8
    $region5: #{tpu_custom_call.1} parent=1 // pred_fallthru
      _
    // Predicated region
    $region6: #{tpu_custom_call.1} parent=1 // pred_check
      _
    $region7: #{tpu_custom_call.1} parent=1 // pred_check_branch
      %29 = sbr.rel (0) target = $region9
    $region8: #{tpu_custom_call.1} parent=1 // pred_region
      %31 = vsyncadd [#allocation6], 0
      %s32 = sshll.u32 %s1, 4
      %s33 = int_to_ptr.hbm [resolvable:$true] %s32
      %s34 = sshll.u32 [#allocation5], 4
      %s35 = int_to_ptr.vmem [resolvable:$true] %s34
      %40 = dma.hbm_to_vmem [thread:$0]  %s33, 512, %s35, [#allocation6], 128, 128, 8
    $region9: #{tpu_custom_call.1} parent=1 // pred_fallthru
      _
    // Predicated region
    $region10: #{tpu_custom_call.1} parent=1 // pred_check
      _
    $region11: #{tpu_custom_call.1} parent=1 // pred_check_branch
      %42 = sbr.rel (0) target = $region13
    $region12: #{tpu_custom_call.1} parent=1 // pred_region
      _
    $region13: #{tpu_custom_call.1} parent=1 // pred_fallthru
      _
    // Predicated region
    $region14: #{tpu_custom_call.1} parent=1 // pred_check
      _
    $region15: #{tpu_custom_call.1} parent=1 // pred_check_branch
      %44 = sbr.rel (0) target = $region17
    $region16: #{tpu_custom_call.1} parent=1 // pred_region
      %46 = vsyncadd [#allocation6], 0
      %s47 = sshll.u32 %s3, 4
      %s48 = int_to_ptr.hbm [resolvable:$true] %s47
      %s49 = sshll.u32 [#allocation7], 4
      %s50 = int_to_ptr.vmem [resolvable:$true] %s49
      %55 = dma.hbm_to_vmem [thread:$0]  %s48, 512, %s50, [#allocation6], 128, 128, 8
    $region17: #{tpu_custom_call.1} parent=1 // pred_fallthru
      _
    // Predicated region
    $region18: #{tpu_custom_call.1} parent=1 // pred_check
      _
    $region19: #{tpu_custom_call.1} parent=1 // pred_check_branch
      %57 = sbr.rel (0) target = $region21
    $region20: #{tpu_custom_call.1} parent=1 // pred_region
      %59 = vsyncadd [#allocation9], 0
      %s60 = sshll.u32 %s4, 4
      %s61 = int_to_ptr.hbm [resolvable:$true] %s60
      %s62 = sshll.u32 [#allocation8], 4
      %s63 = int_to_ptr.vmem [resolvable:$true] %s62
      %68 = dma.hbm_to_vmem [thread:$0]  %s61, 512, %s63, [#allocation9], 128, 128, 8
    $region21: #{tpu_custom_call.1} parent=1 // pred_fallthru
      _
    // Predicated region
    $region22: #{tpu_custom_call.1} parent=1 // pred_check
      _
    $region23: #{tpu_custom_call.1} parent=1 // pred_check_branch
      %70 = sbr.rel (0) target = $region25
    $region24: #{tpu_custom_call.1} parent=1 // pred_region
      _
    $region25: #{tpu_custom_call.1} parent=1 // pred_fallthru
      _
    // Predicated region
    $region26: #{tpu_custom_call.1} parent=1 // pred_check
      _
    $region27: #{tpu_custom_call.1} parent=1 // pred_check_branch
      %72 = sbr.rel (0) target = $region29
    $region28: #{tpu_custom_call.1} parent=1 // pred_region
      %74 = dma.done [#allocation3], 256
    $region29: #{tpu_custom_call.1} parent=1 // pred_fallthru
      _
    // Predicated region
    $region30: #{tpu_custom_call.1} parent=1 // pred_check
      _
    $region31: #{tpu_custom_call.1} parent=1 // pred_check_branch
      %76 = sbr.rel (0) target = $region33
    $region32: #{tpu_custom_call.1} parent=1 // pred_region
      %78 = dma.done [#allocation6], 512
    $region33: #{tpu_custom_call.1} parent=1 // pred_fallthru
      _
    // Predicated region
    $region34: #{tpu_custom_call.1} parent=1 // pred_check
      _
    $region35: #{tpu_custom_call.1} parent=1 // pred_check_branch
      %80 = sbr.rel (0) target = $region37
    $region36: #{tpu_custom_call.1} parent=1 // pred_region
      %82 = dma.done [#allocation6], 512
    $region37: #{tpu_custom_call.1} parent=1 // pred_fallthru
      _
    // Predicated region
    $region38: #{tpu_custom_call.1} parent=1 // pred_check
      _
    $region39: #{tpu_custom_call.1} parent=1 // pred_check_branch
      %84 = sbr.rel (0) target = $region41
    $region40: #{tpu_custom_call.1} parent=1 // pred_region
      %86 = dma.done [#allocation9], 512
    $region41: #{tpu_custom_call.1} parent=1 // pred_fallthru
      _
    %v87 = vld [vmem:[#allocation2] sm:$0xff]
    %v88 = vld [vmem:[#allocation2 + $0x8] sm:$0xff]
    %v89 = vld [vmem:[#allocation5] sm:$0xff]
    %v90 = vld [vmem:[#allocation5 + $0x8] sm:$0xff]
    %v91 = vld [vmem:[#allocation5 + $0x10] sm:$0xff]
    %v92 = vld [vmem:[#allocation5 + $0x18] sm:$0xff]
    %v93 = vld [vmem:[%s2] sm:$0x1]
    %v95 = vperm.slane %v93, 0
    %vm97 = vcmask 261120
    %v99 = vsel %vm97, %v87, 0
    %v102 = vsel %vm97, %v88, 0
    %104 = vmatpush.msra.mxu0 0.0
    %105 = vmatpush.msra.mxu0 0.0
    %106 = vmatpush.msra.mxu0 0.0
    %107 = vmatpush.msra.mxu0 0.0
    %108 = vmatpush.msra.mxu0 0.0
    %109 = vmatpush.msra.mxu0 0.0
    %110 = vmatpush.msra.mxu0 0.0
    %111 = vmatpush.msra.mxu0 0.0
    %112 = vmatpush.msra.mxu0 0.0
    %113 = vmatpush.msra.mxu0 0.0
    %114 = vmatpush.msra.mxu0 0.0
    %115 = vmatpush.msra.mxu0 0.0
    %116 = vmatpush.msra.mxu0 %v92
    %117 = vmatpush.msra.mxu0 %v91
    %118 = vmatpush.msra.mxu0 %v90
    %119 = vmatpush.msra.mxu0 %v89
    %120 = vmatmul.f32.gmra.mxu0 %v99
    %v121 = vpop.f32.mrf.mxu0
    %v122 = vadd.f32 %v95, %v121
    %123 = vmatmul.f32.gmra.mxu0 %v102
    %v124 = vpop.f32.mrf.mxu0
    %v125 = vadd.f32 %v95, %v124
    %126 = vdwg.mxu0
    %v127 = vtanh.pop %v122
    %v128 = vtanh.pop %v125
    %v129 = vld [vmem:[#allocation7] sm:$0xff]
    %v130 = vld [vmem:[#allocation7 + $0x8] sm:$0xff]
    %v131 = vld [vmem:[#allocation7 + $0x10] sm:$0xff]
    %v132 = vld [vmem:[#allocation7 + $0x18] sm:$0xff]
    %v134 = vsel %vm97, %v127, 0
    %v137 = vsel %vm97, %v128, 0
    %139 = vmatpush.msra.mxu0 0.0
    %140 = vmatpush.msra.mxu0 0.0
    %141 = vmatpush.msra.mxu0 0.0
    %142 = vmatpush.msra.mxu0 0.0
    %143 = vmatpush.msra.mxu0 0.0
    %144 = vmatpush.msra.mxu0 0.0
    %145 = vmatpush.msra.mxu0 0.0
    %146 = vmatpush.msra.mxu0 0.0
    %147 = vmatpush.msra.mxu0 0.0
    %148 = vmatpush.msra.mxu0 0.0
    %149 = vmatpush.msra.mxu0 0.0
    %150 = vmatpush.msra.mxu0 0.0
    %151 = vmatpush.msra.mxu0 %v132
    %152 = vmatpush.msra.mxu0 %v131
    %153 = vmatpush.msra.mxu0 %v130
    %154 = vmatpush.msra.mxu0 %v129
    %155 = vmatmul.f32.gmra.mxu0 %v134
    %v156 = vpop.f32.mrf.mxu0
    %v157 = vadd.f32 0.0, %v156
    %158 = vmatmul.f32.gmra.mxu0 %v137
    %v159 = vpop.f32.mrf.mxu0
    %v160 = vadd.f32 0.0, %v159
    %161 = vdwg.mxu0
    %v162 = vsel %vm97, %v157, -inf
    %v163 = vrot.slane %v162, 4
    %v164 = vmax.f32 %v162, %v163
    %v165 = vrot.slane %v164, 2
    %v166 = vmax.f32 %v164, %v165
    %v167 = vrot.slane %v166, 1
    %v168 = vmax.f32 %v166, %v167
    %v169 = vsel %vm97, %v160, -inf
    %v170 = vrot.slane %v169, 4
    %v171 = vmax.f32 %v169, %v170
    %v172 = vrot.slane %v171, 2
    %v173 = vmax.f32 %v171, %v172
    %v174 = vrot.slane %v173, 1
    %v175 = vmax.f32 %v173, %v174
    %v176 = vsub.f32 %v157, %v168
    %v177 = vsub.f32 %v160, %v175
    %v178 = vmul.f32 %v176, 1.442695
    %v179 = vpow.pop %v178
    %v180 = vmul.f32 %v177, 1.442695
    %v181 = vpow.pop %v180
    %v182 = vsel %vm97, %v179, 0.0
    %v183 = vrot.slane %v182, 4
    %v184 = vadd.f32 %v182, %v183
    %v185 = vrot.slane %v184, 2
    %v186 = vadd.f32 %v184, %v185
    %v187 = vrot.slane %v186, 1
    %v188 = vadd.f32 %v186, %v187
    %v189 = vsel %vm97, %v181, 0.0
    %v190 = vrot.slane %v189, 4
    %v191 = vadd.f32 %v189, %v190
    %v192 = vrot.slane %v191, 2
    %v193 = vadd.f32 %v191, %v192
    %v194 = vrot.slane %v193, 1
    %v195 = vadd.f32 %v193, %v194
    %v196 = vrcp.pop %v188
    %v197 = vmul.f32 %v188, %v196
    %v198 = vsub.f32 1.0, %v197
    %v199 = vmul.f32 %v196, %v198
    %v200 = vadd.f32 %v196, %v199
    %vm201 = vweird.f32 %v188
    %vm202 = vweird.f32 %v196
    %vm203 = vmor %vm201, %vm202
    %v204 = vsel %vm203, %v196, %v200
    %v205 = vand.u32 2147483647, %v188
    %vm206 = vcmp.eq.f32.partialorder %v205, 8.507059e+37
    %v207 = vand.u32 %v188, 2147483648
    %v208 = vor.u32 1.1754944e-38, %v207
    %v209 = vsel %vm206, %v208, %v204
    %v210 = vrcp.pop %v195
    %v211 = vmul.f32 %v195, %v210
    %v212 = vsub.f32 1.0, %v211
    %v213 = vmul.f32 %v210, %v212
    %v214 = vadd.f32 %v210, %v213
    %vm215 = vweird.f32 %v195
    %vm216 = vweird.f32 %v210
    %vm217 = vmor %vm215, %vm216
    %v218 = vsel %vm217, %v210, %v214
    %v219 = vand.u32 2147483647, %v195
    %vm220 = vcmp.eq.f32.partialorder %v219, 8.507059e+37
    %v221 = vand.u32 %v195, 2147483648
    %v222 = vor.u32 1.1754944e-38, %v221
    %v223 = vsel %vm220, %v222, %v218
    %v224 = vmul.f32 %v179, %v209
    %v225 = vmul.f32 %v181, %v223
    %v226 = vmul.f32 %v224, %v87
    %v227 = vmul.f32 %v225, %v88
    %v228 = vld [vmem:[#allocation8] sm:$0xff]
    %v229 = vld [vmem:[#allocation8 + $0x8] sm:$0xff]
    %v230 = vld [vmem:[#allocation8 + $0x10] sm:$0xff]
    %v231 = vld [vmem:[#allocation8 + $0x18] sm:$0xff]
    %v232 = vld [vmem:[%s5] sm:$0x1]
    %v234 = vperm.slane %v232, 0
    %v237 = vsel %vm97, %v226, 0
    %v240 = vsel %vm97, %v227, 0
    %242 = vmatpush.msra.mxu0 0.0
    %243 = vmatpush.msra.mxu0 0.0
    %244 = vmatpush.msra.mxu0 0.0
    %245 = vmatpush.msra.mxu0 0.0
    %246 = vmatpush.msra.mxu0 0.0
    %247 = vmatpush.msra.mxu0 0.0
    %248 = vmatpush.msra.mxu0 0.0
    %249 = vmatpush.msra.mxu0 0.0
    %250 = vmatpush.msra.mxu0 0.0
    %251 = vmatpush.msra.mxu0 0.0
    %252 = vmatpush.msra.mxu0 0.0
    %253 = vmatpush.msra.mxu0 0.0
    %254 = vmatpush.msra.mxu0 %v231
    %255 = vmatpush.msra.mxu0 %v230
    %256 = vmatpush.msra.mxu0 %v229
    %257 = vmatpush.msra.mxu0 %v228
    %258 = vmatmul.f32.gmra.mxu0 %v237
    %v259 = vpop.f32.mrf.mxu0
    %v260 = vadd.f32 %v234, %v259
    %261 = vmatmul.f32.gmra.mxu0 %v240
    %v262 = vpop.f32.mrf.mxu0
    %v263 = vadd.f32 %v234, %v262
    %264 = vdwg.mxu0
    %265 = vst [vmem:[#allocation10] sm:$0xff] %v260
    %266 = vst [vmem:[#allocation10 + $0x8] sm:$0xff] %v263
    // Predicated region
    $region42: #{tpu_custom_call.1} parent=1 // pred_check
      _
    $region43: #{tpu_custom_call.1} parent=1 // pred_check_branch
      %268 = sbr.rel (0) target = $region45
    $region44: #{tpu_custom_call.1} parent=1 // pred_region
      %270 = vsyncadd [#allocation4], 0
      %s271 = sshll.u32 [#allocation10], 4
      %s272 = int_to_ptr.vmem [resolvable:$true] %s271
      %s273 = sshll.u32 %s6, 4
      %s274 = int_to_ptr.hbm [resolvable:$true] %s273
      %279 = dma.vmem_to_hbm [thread:$0]  %s272, 256, %s274, [#allocation4], 128, 128, 8
    $region45: #{tpu_custom_call.1} parent=1 // pred_fallthru
      _
    // Predicated region
    $region46: #{tpu_custom_call.1} parent=1 // pred_check
      _
    $region47: #{tpu_custom_call.1} parent=1 // pred_check_branch
      %281 = sbr.rel (0) target = $region49
    $region48: #{tpu_custom_call.1} parent=1 // pred_region
      %283 = dma.done [#allocation4], 256
    $region49: #{tpu_custom_call.1} parent=1 // pred_fallthru
      _
    %284 = vsyncpa [#allocation3], 1
    %285 = vsyncpa [#allocation6], 1
    %286 = vsyncpa [#allocation9], 1
    %287 = vsyncpa [#allocation4], 1

</llo_original>
